<compile_context>
chip_gen: v6e
topology: v6e:2x2x1
jax: 0.10.0
libtpu: 0.0.40
codegen_flags: <defaults>
</compile_context>

<pallas_src>
import jax
import jax.numpy as jnp
from jax.experimental import pallas as pl
from jax.experimental.pallas import tpu as pltpu

NUM_HEADS = 8
H1 = 128
H2 = 64
LANE = 128


def _round_up(x, m):
    return ((x + m - 1) // m) * m


def qnetwork_kernel(x_ref, w1_ref, b1_ref, w2_ref, b2_ref, wh_ref, bh_ref, out_ref):
    # Trunk: Linear(obs,128) + ReLU, Linear(128,64) + ReLU.
    # Matmul inputs bf16, accumulation f32, bias/ReLU epilogue f32.
    x = x_ref[...]                                                   # bf16 (TB, obs)
    h1 = jnp.dot(x, w1_ref[...], preferred_element_type=jnp.float32) + b1_ref[...]
    h1 = jnp.maximum(h1, 0.0)                                        # f32 (TB, 128)
    h2 = jnp.dot(h1.astype(jnp.bfloat16), w2_ref[...],
                 preferred_element_type=jnp.float32) + b2_ref[...]
    h2 = jnp.maximum(h2, 0.0)                                        # f32 (TB, 64)

    # All 8 heads fused into one (64, 128) matmul; lane-dense unmasked 128-wide store.
    out = jnp.dot(h2.astype(jnp.bfloat16), wh_ref[...],
                  preferred_element_type=jnp.float32) + bh_ref[...]
    out_ref[...] = out                                               # f32 (TB, 128)


def qnetwork_forward(x, params):
    w1, b1, w2, b2, wh, bh = params
    B, obs = x.shape
    A = wh.shape[-1]
    HA = NUM_HEADS * A
    out_pad = max(LANE, _round_up(HA, LANE))

    # --- Fuse + pad head weights: (8, 64, A) -> (64, 8*A) -> (64, out_pad) ---
    wh_flat = jnp.transpose(wh, (1, 0, 2)).reshape(H2, HA)
    wh_flat = jnp.pad(wh_flat, ((0, 0), (0, out_pad - HA)))
    bh_flat = jnp.pad(bh.reshape(1, HA), ((0, 0), (0, out_pad - HA)))

    # --- Batch tiling: 256-row tiles for big batches (MXU occupancy), else one tile ---
    TB = 256 if B >= 256 else _round_up(B, 8)
    B_pad = _round_up(B, TB)
    x_p = jnp.pad(x, ((0, B_pad - B), (0, 0)))

    # --- bf16 at the boundary for matmul operands; biases stay f32 ---
    x_bf = x_p.astype(jnp.bfloat16)
    w1_bf = w1.astype(jnp.bfloat16)
    w2_bf = w2.astype(jnp.bfloat16)
    wh_bf = wh_flat.astype(jnp.bfloat16)
    b1_f = b1.astype(jnp.float32)
    b2_f = b2.astype(jnp.float32)
    bh_f = bh_flat.astype(jnp.float32)

    grid = (B_pad // TB,)
    batched = lambda shape: pl.BlockSpec(shape, lambda i: (i, 0))     # tiled over batch
    resident = lambda shape: pl.BlockSpec(shape, lambda i: (0, 0))    # weights: DMA'd once

    out_flat = pl.pallas_call(
        qnetwork_kernel,
        out_shape=jax.ShapeDtypeStruct((B_pad, out_pad), jnp.float32),
        grid=grid,
        in_specs=[
            batched((TB, obs)),        # x
            resident((obs, H1)),       # w1
            resident((1, H1)),         # b1
            resident((H1, H2)),        # w2
            resident((1, H2)),         # b2
            resident((H2, out_pad)),   # wh (fused heads, padded)
            resident((1, out_pad)),    # bh (fused heads, padded)
        ],
        out_specs=batched((TB, out_pad)),
        compiler_params=pltpu.CompilerParams(dimension_semantics=("parallel",)),
    )(x_bf, w1_bf, b1_f, w2_bf, b2_f, wh_bf, bh_f)

    # Free wrapper-side layout plumbing: drop padding, restore (B, 8, A) head stacking.
    return out_flat[:B, :HA].reshape(B, NUM_HEADS, A)


def init_params(key, obs_size, action_size):
    """Deterministic synthetic parameters (shapes match the nn.Linear layers)."""
    ks = jax.random.split(key, 6)
    w1 = jax.random.normal(ks[0], (obs_size, H1), jnp.float32) * 0.05
    b1 = jax.random.normal(ks[1], (1, H1), jnp.float32) * 0.05
    w2 = jax.random.normal(ks[2], (H1, H2), jnp.float32) * 0.05
    b2 = jax.random.normal(ks[3], (1, H2), jnp.float32) * 0.05
    wh = jax.random.normal(ks[4], (NUM_HEADS, H2, action_size), jnp.float32) * 0.05
    bh = jax.random.normal(ks[5], (NUM_HEADS, 1, action_size), jnp.float32) * 0.05
    return w1, b1, w2, b2, wh, bh


def qnetwork_reference(x, params, mimic_bf16=True):
    """Pure-JAX reference matching the PyTorch forward pass.

    With mimic_bf16=True the matmul operands are rounded to bf16 (as in the kernel)
    so comparison isolates kernel correctness from the intentional precision choice.
    """
    w1, b1, w2, b2, wh, bh = params
    cast = (lambda a: a.astype(jnp.bfloat16).astype(jnp.float32)) if mimic_bf16 else (lambda a: a)
    h = jnp.maximum(jnp.dot(cast(x), cast(w1)) + b1, 0.0)
    h = jnp.maximum(jnp.dot(cast(h), cast(w2)) + b2, 0.0)
    outs = [jnp.dot(cast(h), cast(wh[i])) + bh[i] for i in range(NUM_HEADS)]
    return jnp.stack(outs, axis=1)


if __name__ == "__main__":
    key = jax.random.PRNGKey(0)
    obs_size = 32
    action_size = 5
    batch = 2

    k_x, k_p = jax.random.split(key)
    x = jax.random.normal(k_x, (batch, obs_size), jnp.float32)
    params = init_params(k_p, obs_size, action_size)

    out = qnetwork_forward(x, params)
    out = jax.block_until_ready(out)

    assert out.shape == (batch, NUM_HEADS, action_size), out.shape

    # Exact-structure check against a bf16-matched reference (tight tolerance).
    ref_bf16 = qnetwork_reference(x, params, mimic_bf16=True)
    assert jnp.allclose(out, ref_bf16, atol=1e-4, rtol=1e-4), "mismatch vs bf16-matched reference"

    # Sanity check against the full-f32 PyTorch-equivalent reference (bf16 rounding tolerance).
    ref_f32 = qnetwork_reference(x, params, mimic_bf16=False)
    assert jnp.allclose(out, ref_f32, atol=5e-2, rtol=5e-2), "mismatch vs f32 reference"

    print("KERNEL_OK")
</pallas_src>

<mosaic_0001>
module attributes {stable_mosaic.version = 11 : i64} {
  func.func @qnetwork_kernel(%arg0: i32, %arg1: memref<8x32xbf16, #tpu.memory_space<vmem>>, %arg2: memref<32x128xbf16, #tpu.memory_space<vmem>>, %arg3: memref<1x128xf32, #tpu.memory_space<vmem>>, %arg4: memref<128x64xbf16, #tpu.memory_space<vmem>>, %arg5: memref<1x64xf32, #tpu.memory_space<vmem>>, %arg6: memref<64x128xbf16, #tpu.memory_space<vmem>>, %arg7: memref<1x128xf32, #tpu.memory_space<vmem>>, %arg8: memref<8x128xf32, #tpu.memory_space<vmem>>) attributes {dimension_semantics = [#tpu.dimension_semantics<parallel>], iteration_bounds = array<i64: 1>, scalar_prefetch = 0 : i64, scratch_operands = 0 : i64, tpu.core_type = #tpu.core_type<tc>, window_params = [{transform_indices = @transform_0, window_bounds = array<i64: 8, 32>}, {pipeline_mode = #tpu.pipeline_mode<synchronous>, transform_indices = @transform_1, window_bounds = array<i64: 32, 128>}, {pipeline_mode = #tpu.pipeline_mode<synchronous>, transform_indices = @transform_2, window_bounds = array<i64: 1, 128>}, {pipeline_mode = #tpu.pipeline_mode<synchronous>, transform_indices = @transform_3, window_bounds = array<i64: 128, 64>}, {pipeline_mode = #tpu.pipeline_mode<synchronous>, transform_indices = @transform_4, window_bounds = array<i64: 1, 64>}, {pipeline_mode = #tpu.pipeline_mode<synchronous>, transform_indices = @transform_5, window_bounds = array<i64: 64, 128>}, {pipeline_mode = #tpu.pipeline_mode<synchronous>, transform_indices = @transform_6, window_bounds = array<i64: 1, 128>}, {transform_indices = @transform_7, window_bounds = array<i64: 8, 128>}]} {
    %c0 = arith.constant 0 : index
    %c0_0 = arith.constant 0 : index
    %0 = vector.load %arg1[%c0, %c0_0] : memref<8x32xbf16, #tpu.memory_space<vmem>>, vector<8x32xbf16>
    %c0_1 = arith.constant 0 : index
    %c0_2 = arith.constant 0 : index
    %1 = vector.load %arg2[%c0_1, %c0_2] : memref<32x128xbf16, #tpu.memory_space<vmem>>, vector<32x128xbf16>
    %cst = arith.constant dense<0.000000e+00> : vector<8x128xf32>
    %2 = tpu.matmul %0, %1, %cst {dimension_numbers = #tpu.dot_dimension_numbers<[1], [0], [0], [1], [0, 0, 1, 1], [], []>} : vector<8x32xbf16>, vector<32x128xbf16>, vector<8x128xf32> -> vector<8x128xf32>
    %c0_3 = arith.constant 0 : index
    %c0_4 = arith.constant 0 : index
    %3 = vector.load %arg3[%c0_3, %c0_4] : memref<1x128xf32, #tpu.memory_space<vmem>>, vector<1x128xf32>
    %4 = vector.broadcast %3 : vector<1x128xf32> to vector<8x128xf32>
    %5 = arith.addf %2, %4 : vector<8x128xf32>
    %cst_5 = arith.constant 0.000000e+00 : f32
    %6 = vector.broadcast %cst_5 : f32 to vector<8x128xf32>
    %7 = arith.maximumf %5, %6 : vector<8x128xf32>
    %8 = arith.truncf %7 : vector<8x128xf32> to vector<8x128xbf16>
    %c0_6 = arith.constant 0 : index
    %c0_7 = arith.constant 0 : index
    %9 = vector.load %arg4[%c0_6, %c0_7] : memref<128x64xbf16, #tpu.memory_space<vmem>>, vector<128x64xbf16>
    %cst_8 = arith.constant dense<0.000000e+00> : vector<8x64xf32>
    %10 = tpu.matmul %8, %9, %cst_8 {dimension_numbers = #tpu.dot_dimension_numbers<[1], [0], [0], [1], [0, 0, 1, 1], [], []>} : vector<8x128xbf16>, vector<128x64xbf16>, vector<8x64xf32> -> vector<8x64xf32>
    %c0_9 = arith.constant 0 : index
    %c0_10 = arith.constant 0 : index
    %11 = vector.load %arg5[%c0_9, %c0_10] : memref<1x64xf32, #tpu.memory_space<vmem>>, vector<1x64xf32>
    %12 = vector.broadcast %11 : vector<1x64xf32> to vector<8x64xf32>
    %13 = arith.addf %10, %12 : vector<8x64xf32>
    %cst_11 = arith.constant 0.000000e+00 : f32
    %14 = vector.broadcast %cst_11 : f32 to vector<8x64xf32>
    %15 = arith.maximumf %13, %14 : vector<8x64xf32>
    %16 = arith.truncf %15 : vector<8x64xf32> to vector<8x64xbf16>
    %c0_12 = arith.constant 0 : index
    %c0_13 = arith.constant 0 : index
    %17 = vector.load %arg6[%c0_12, %c0_13] : memref<64x128xbf16, #tpu.memory_space<vmem>>, vector<64x128xbf16>
    %cst_14 = arith.constant dense<0.000000e+00> : vector<8x128xf32>
    %18 = tpu.matmul %16, %17, %cst_14 {dimension_numbers = #tpu.dot_dimension_numbers<[1], [0], [0], [1], [0, 0, 1, 1], [], []>} : vector<8x64xbf16>, vector<64x128xbf16>, vector<8x128xf32> -> vector<8x128xf32>
    %c0_15 = arith.constant 0 : index
    %c0_16 = arith.constant 0 : index
    %19 = vector.load %arg7[%c0_15, %c0_16] : memref<1x128xf32, #tpu.memory_space<vmem>>, vector<1x128xf32>
    %20 = vector.broadcast %19 : vector<1x128xf32> to vector<8x128xf32>
    %21 = arith.addf %18, %20 : vector<8x128xf32>
    %c0_17 = arith.constant 0 : index
    %c0_18 = arith.constant 0 : index
    %22 = vector.load %arg8[%c0_17, %c0_18] : memref<8x128xf32, #tpu.memory_space<vmem>>, vector<8x128xf32>
    tpu.vector_store %arg8[%c0_17, %c0_18], %21 {strides = array<i32>} : memref<8x128xf32, #tpu.memory_space<vmem>>, vector<8x128xf32>,
    return
  }
  func.func @transform_0(%arg0: i32) -> (i32, i32) {
    %c0_i32 = arith.constant 0 : i32
    %c0_i32_0 = arith.constant 0 : i32
    return %arg0, %c0_i32 : i32, i32
  }
  func.func @transform_1(%arg0: i32) -> (i32, i32) {
    %c0_i32 = arith.constant 0 : i32
    %c0_i32_0 = arith.constant 0 : i32
    %c0_i32_1 = arith.constant 0 : i32
    return %c0_i32, %c0_i32_0 : i32, i32
  }
  func.func @transform_2(%arg0: i32) -> (i32, i32) {
    %c0_i32 = arith.constant 0 : i32
    %c0_i32_0 = arith.constant 0 : i32
    %c0_i32_1 = arith.constant 0 : i32
    return %c0_i32, %c0_i32_0 : i32, i32
  }
  func.func @transform_3(%arg0: i32) -> (i32, i32) {
    %c0_i32 = arith.constant 0 : i32
    %c0_i32_0 = arith.constant 0 : i32
    %c0_i32_1 = arith.constant 0 : i32
    return %c0_i32, %c0_i32_0 : i32, i32
  }
  func.func @transform_4(%arg0: i32) -> (i32, i32) {
    %c0_i32 = arith.constant 0 : i32
    %c0_i32_0 = arith.constant 0 : i32
    %c0_i32_1 = arith.constant 0 : i32
    return %c0_i32, %c0_i32_0 : i32, i32
  }
  func.func @transform_5(%arg0: i32) -> (i32, i32) {
    %c0_i32 = arith.constant 0 : i32
    %c0_i32_0 = arith.constant 0 : i32
    %c0_i32_1 = arith.constant 0 : i32
    return %c0_i32, %c0_i32_0 : i32, i32
  }
  func.func @transform_6(%arg0: i32) -> (i32, i32) {
    %c0_i32 = arith.constant 0 : i32
    %c0_i32_0 = arith.constant 0 : i32
    %c0_i32_1 = arith.constant 0 : i32
    return %c0_i32, %c0_i32_0 : i32, i32
  }
  func.func @transform_7(%arg0: i32) -> (i32, i32) {
    %c0_i32 = arith.constant 0 : i32
    %c0_i32_0 = arith.constant 0 : i32
    return %arg0, %c0_i32 : i32, i32
  }
}

</mosaic_0001>

<llo_original>
// kernel: tpu_custom_call.1
$region0: #{tpu_custom_call.1}
  #allocation0 [shape = 'u32[]', space=smem, size = 0x4, offset = 0x4, fixed_abs, tag = 'smem constant byte address 0x4 - core index']
  #allocation1 [shape = 'u32[144,128]{1,0:T(1,128)}', space=vmem, size = 0x12000, scoped, tag = 'internal scratch']
  %s0 = inlined_call_operand.vmem [shape: bf16[8,32], index: 0, kind: input, shape index: {}]
  %s1 = inlined_call_operand.vmem [shape: bf16[32,128], index: 1, kind: input, shape index: {}]
  %s2 = inlined_call_operand.vmem [shape: f32[1,128], index: 2, kind: input, shape index: {}]
  %s3 = inlined_call_operand.vmem [shape: bf16[128,64], index: 3, kind: input, shape index: {}]
  %s4 = inlined_call_operand.vmem [shape: f32[1,64], index: 4, kind: input, shape index: {}]
  %s5 = inlined_call_operand.vmem [shape: bf16[64,128], index: 5, kind: input, shape index: {}]
  %s6 = inlined_call_operand.vmem [shape: f32[1,128], index: 6, kind: input, shape index: {}]
  %s7 = inlined_call_operand.hbm [shape: f32[8,128], index: 7, kind: output, shape index: {}]
  %s8 = sld [smem:[#allocation0]]
  $region38: #{tpu_custom_call.1} parent=0
    _
  %s10 = ssub.s32 1, %s8
  %s11 = scalar_select 0, %s10, %s8
  $region1: #{tpu_custom_call.1} parent=0
    #allocation2 [shape = 'u8[4096]{0}', space=vmem, size = 0x1000, scoped, tag = 'output window, operand 0, single buffered']
    #allocation3 [shape = 's32[1]{0}', space=sflag, size = 0x4, scoped, tag = 'scoped memory for tpu_custom_call.1']
    %12 = vsyncpa [#allocation3], 0
    // Predicated region
    $region2: #{tpu_custom_call.1} parent=1 // pred_check
      _
    $region3: #{tpu_custom_call.1} parent=1 // pred_check_branch
      %14 = sbr.rel (0) target = $region5
    $region4: #{tpu_custom_call.1} parent=1 // pred_region
      _
    $region5: #{tpu_custom_call.1} parent=1 // pred_fallthru
      _
    // Predicated region
    $region6: #{tpu_custom_call.1} parent=1 // pred_check
      _
    $region7: #{tpu_custom_call.1} parent=1 // pred_check_branch
      %16 = sbr.rel (0) target = $region9
    $region8: #{tpu_custom_call.1} parent=1 // pred_region
      _
    $region9: #{tpu_custom_call.1} parent=1 // pred_fallthru
      _
    // Predicated region
    $region10: #{tpu_custom_call.1} parent=1 // pred_check
      _
    $region11: #{tpu_custom_call.1} parent=1 // pred_check_branch
      %18 = sbr.rel (0) target = $region13
    $region12: #{tpu_custom_call.1} parent=1 // pred_region
      _
    $region13: #{tpu_custom_call.1} parent=1 // pred_fallthru
      _
    // Predicated region
    $region14: #{tpu_custom_call.1} parent=1 // pred_check
      _
    $region15: #{tpu_custom_call.1} parent=1 // pred_check_branch
      %20 = sbr.rel (0) target = $region17
    $region16: #{tpu_custom_call.1} parent=1 // pred_region
      _
    $region17: #{tpu_custom_call.1} parent=1 // pred_fallthru
      _
    // Predicated region
    $region18: #{tpu_custom_call.1} parent=1 // pred_check
      _
    $region19: #{tpu_custom_call.1} parent=1 // pred_check_branch
      %22 = sbr.rel (0) target = $region21
    $region20: #{tpu_custom_call.1} parent=1 // pred_region
      _
    $region21: #{tpu_custom_call.1} parent=1 // pred_fallthru
      _
    // Predicated region
    $region22: #{tpu_custom_call.1} parent=1 // pred_check
      _
    $region23: #{tpu_custom_call.1} parent=1 // pred_check_branch
      %24 = sbr.rel (0) target = $region25
    $region24: #{tpu_custom_call.1} parent=1 // pred_region
      _
    $region25: #{tpu_custom_call.1} parent=1 // pred_fallthru
      _
    // Predicated region
    $region26: #{tpu_custom_call.1} parent=1 // pred_check
      _
    $region27: #{tpu_custom_call.1} parent=1 // pred_check_branch
      %26 = sbr.rel (0) target = $region29
    $region28: #{tpu_custom_call.1} parent=1 // pred_region
      _
    $region29: #{tpu_custom_call.1} parent=1 // pred_fallthru
      _
    %v28 = vld [vmem:[%s0] sm:$0xf]
    %v29 = vld [vmem:[%s1] sm:$0xf]
    %v30 = vld [vmem:[%s1 + $0x4] sm:$0xf]
    %v31 = vld [vmem:[%s1 + $0x8] sm:$0xf]
    %v32 = vld [vmem:[%s1 + $0xc] sm:$0xf]
    %v33 = vld [vmem:[%s2] sm:$0x1]
    %v35 = vlaneseq
    %v36 = vshrl.u32 %v35, 7
    %v37 = vsub.s32 0, %v36
    %v38 = vrot.slane %v33, %v37
    %v44 = vunpack.c.l.b16 %v29
    %v45 = vunpack.c.l.b16 %v30
    %v46 = vunpack.c.l.b16 %v31
    %v47 = vunpack.c.l.b16 %v32
    %v48 = vpack.c.b16 %v45, %v44
    %v49 = vpack.c.b16 %v47, %v46
    %vm52 = vcmask 261120
    %v54 = vsel %vm52, %v28, 0
    %56 = vmatprep.subr.bf16.mxu0 0
    %57 = vmatpush1.bf16.msra.mxu0 0
    %58 = vmatprep.subr.bf16.mxu0 0
    %59 = vmatpush1.bf16.msra.mxu0 0
    %60 = vmatprep.subr.bf16.mxu0 0
    %61 = vmatpush1.bf16.msra.mxu0 0
    %62 = vmatprep.subr.bf16.mxu0 0
    %63 = vmatpush1.bf16.msra.mxu0 0
    %64 = vmatprep.subr.bf16.mxu0 0
    %65 = vmatpush1.bf16.msra.mxu0 0
    %66 = vmatprep.subr.bf16.mxu0 0
    %67 = vmatpush1.bf16.msra.mxu0 0
    %68 = vmatprep.subr.bf16.mxu0 0
    %69 = vmatpush1.bf16.msra.mxu0 %v49
    %70 = vmatprep.subr.bf16.mxu0 0
    %71 = vmatpush1.bf16.msra.mxu0 %v48
    %72 = vmatprep.subr.bf16.mxu0 0
    %73 = vmatpush2.bf16.msra.mxu0 0
    %74 = vmatprep.subr.bf16.mxu0 0
    %75 = vmatpush2.bf16.msra.mxu0 0
    %76 = vmatprep.subr.bf16.mxu0 0
    %77 = vmatpush2.bf16.msra.mxu0 0
    %78 = vmatprep.subr.bf16.mxu0 0
    %79 = vmatpush2.bf16.msra.mxu0 0
    %80 = vmatprep.subr.bf16.mxu0 0
    %81 = vmatpush2.bf16.msra.mxu0 0
    %82 = vmatprep.subr.bf16.mxu0 0
    %83 = vmatpush2.bf16.msra.mxu0 0
    %84 = vmatprep.subr.bf16.mxu0 0
    %85 = vmatpush2.bf16.msra.mxu0 0
    %86 = vmatprep.subr.bf16.mxu0 0
    %87 = vmatpush2.bf16.msra.mxu0 0
    %88 = vmatprep.mubr.bf16.mxu0 0
    %89 = vmatmul.mubr.bf16.gmra.mxu0 %v54
    %v90 = vpop.f32.mrf.mxu0
    %v91 = vadd.f32 %v38, %v90
    %v92 = vpop.f32.mrf.mxu0
    %v93 = vpop.f32.mrf.mxu0
    %v94 = vpop.f32.mrf.mxu0
    %95 = vdwg.mxu0
    %v96 = vmax.f32 %v91, 0.0
    %v97 = vpack.c.bf16 %v96, %v96
    %v98 = vld [vmem:[%s3] sm:$0xf]
    %v99 = vld [vmem:[%s3 + $0x4] sm:$0xf]
    %v100 = vld [vmem:[%s3 + $0x8] sm:$0xf]
    %v101 = vld [vmem:[%s3 + $0xc] sm:$0xf]
    %v102 = vld [vmem:[%s3 + $0x10] sm:$0xf]
    %v103 = vld [vmem:[%s3 + $0x14] sm:$0xf]
    %v104 = vld [vmem:[%s3 + $0x18] sm:$0xf]
    %v105 = vld [vmem:[%s3 + $0x1c] sm:$0xf]
    %v106 = vld [vmem:[%s3 + $0x20] sm:$0xf]
    %v107 = vld [vmem:[%s3 + $0x24] sm:$0xf]
    %v108 = vld [vmem:[%s3 + $0x28] sm:$0xf]
    %v109 = vld [vmem:[%s3 + $0x2c] sm:$0xf]
    %v110 = vld [vmem:[%s3 + $0x30] sm:$0xf]
    %v111 = vld [vmem:[%s3 + $0x34] sm:$0xf]
    %v112 = vld [vmem:[%s3 + $0x38] sm:$0xf]
    %v113 = vld [vmem:[%s3 + $0x3c] sm:$0xf]
    %v114 = vld [vmem:[%s4] sm:$0x1]
    %v116 = vlaneseq
    %v117 = vshrl.u32 %v116, 7
    %v118 = vsub.s32 0, %v117
    %v119 = vrot.slane %v114, %v118
    %v137 = vunpack.c.l.b16 %v98
    %v138 = vunpack.c.l.b16 %v99
    %v139 = vunpack.c.l.b16 %v100
    %v140 = vunpack.c.l.b16 %v101
    %v141 = vunpack.c.l.b16 %v102
    %v142 = vunpack.c.l.b16 %v103
    %v143 = vunpack.c.l.b16 %v104
    %v144 = vunpack.c.l.b16 %v105
    %v145 = vunpack.c.l.b16 %v106
    %v146 = vunpack.c.l.b16 %v107
    %v147 = vunpack.c.l.b16 %v108
    %v148 = vunpack.c.l.b16 %v109
    %v149 = vunpack.c.l.b16 %v110
    %v150 = vunpack.c.l.b16 %v111
    %v151 = vunpack.c.l.b16 %v112
    %v152 = vunpack.c.l.b16 %v113
    %v153 = vpack.c.b16 %v138, %v137
    %v154 = vpack.c.b16 %v140, %v139
    %v155 = vpack.c.b16 %v142, %v141
    %v156 = vpack.c.b16 %v144, %v143
    %v157 = vpack.c.b16 %v146, %v145
    %v158 = vpack.c.b16 %v148, %v147
    %v159 = vpack.c.b16 %v150, %v149
    %v160 = vpack.c.b16 %v152, %v151
    %169 = vmatprep.subr.bf16.mxu0 0
    %170 = vmatpush1.bf16.msra.mxu0 %v160
    %171 = vmatprep.subr.bf16.mxu0 0
    %172 = vmatpush1.bf16.msra.mxu0 %v159
    %173 = vmatprep.subr.bf16.mxu0 0
    %174 = vmatpush1.bf16.msra.mxu0 %v158
    %175 = vmatprep.subr.bf16.mxu0 0
    %176 = vmatpush1.bf16.msra.mxu0 %v157
    %177 = vmatprep.subr.bf16.mxu0 0
    %178 = vmatpush1.bf16.msra.mxu0 %v156
    %179 = vmatprep.subr.bf16.mxu0 0
    %180 = vmatpush1.bf16.msra.mxu0 %v155
    %181 = vmatprep.subr.bf16.mxu0 0
    %182 = vmatpush1.bf16.msra.mxu0 %v154
    %183 = vmatprep.subr.bf16.mxu0 0
    %184 = vmatpush1.bf16.msra.mxu0 %v153
    %185 = vmatprep.subr.bf16.mxu0 0
    %186 = vmatpush2.bf16.msra.mxu0 0
    %187 = vmatprep.subr.bf16.mxu0 0
    %188 = vmatpush2.bf16.msra.mxu0 0
    %189 = vmatprep.subr.bf16.mxu0 0
    %190 = vmatpush2.bf16.msra.mxu0 0
    %191 = vmatprep.subr.bf16.mxu0 0
    %192 = vmatpush2.bf16.msra.mxu0 0
    %193 = vmatprep.subr.bf16.mxu0 0
    %194 = vmatpush2.bf16.msra.mxu0 0
    %195 = vmatprep.subr.bf16.mxu0 0
    %196 = vmatpush2.bf16.msra.mxu0 0
    %197 = vmatprep.subr.bf16.mxu0 0
    %198 = vmatpush2.bf16.msra.mxu0 0
    %199 = vmatprep.subr.bf16.mxu0 0
    %200 = vmatpush2.bf16.msra.mxu0 0
    %201 = vmatprep.mubr.bf16.mxu0 0
    %202 = vmatmul.mubr.bf16.gmra.mxu0 %v97
    %v203 = vpop.f32.mrf.mxu0
    %v204 = vadd.f32 %v119, %v203
    %v205 = vpop.f32.mrf.mxu0
    %v206 = vpop.f32.mrf.mxu0
    %v207 = vpop.f32.mrf.mxu0
    %208 = vdwg.mxu0
    %v209 = vmax.f32 %v204, 0.0
    %v210 = vpack.c.bf16 %v209, %v209
    %v211 = vld [vmem:[%s5] sm:$0xf]
    %v212 = vld [vmem:[%s5 + $0x4] sm:$0xf]
    %v213 = vld [vmem:[%s5 + $0x8] sm:$0xf]
    %v214 = vld [vmem:[%s5 + $0xc] sm:$0xf]
    %v215 = vld [vmem:[%s5 + $0x10] sm:$0xf]
    %v216 = vld [vmem:[%s5 + $0x14] sm:$0xf]
    %v217 = vld [vmem:[%s5 + $0x18] sm:$0xf]
    %v218 = vld [vmem:[%s5 + $0x1c] sm:$0xf]
    %v219 = vld [vmem:[%s6] sm:$0x1]
    %v221 = vlaneseq
    %v222 = vshrl.u32 %v221, 7
    %v223 = vsub.s32 0, %v222
    %v224 = vrot.slane %v219, %v223
    %v234 = vunpack.c.l.b16 %v211
    %v235 = vunpack.c.l.b16 %v212
    %v236 = vunpack.c.l.b16 %v213
    %v237 = vunpack.c.l.b16 %v214
    %v238 = vunpack.c.l.b16 %v215
    %v239 = vunpack.c.l.b16 %v216
    %v240 = vunpack.c.l.b16 %v217
    %v241 = vunpack.c.l.b16 %v218
    %v242 = vpack.c.b16 %v235, %v234
    %v243 = vpack.c.b16 %v237, %v236
    %v244 = vpack.c.b16 %v239, %v238
    %v245 = vpack.c.b16 %v241, %v240
    %vm250 = vcmask 523264
    %v252 = vsel %vm250, %v210, 0
    %254 = vmatprep.subr.bf16.mxu0 0
    %255 = vmatpush1.bf16.msra.mxu0 0
    %256 = vmatprep.subr.bf16.mxu0 0
    %257 = vmatpush1.bf16.msra.mxu0 0
    %258 = vmatprep.subr.bf16.mxu0 0
    %259 = vmatpush1.bf16.msra.mxu0 0
    %260 = vmatprep.subr.bf16.mxu0 0
    %261 = vmatpush1.bf16.msra.mxu0 0
    %262 = vmatprep.subr.bf16.mxu0 0
    %263 = vmatpush1.bf16.msra.mxu0 %v245
    %264 = vmatprep.subr.bf16.mxu0 0
    %265 = vmatpush1.bf16.msra.mxu0 %v244
    %266 = vmatprep.subr.bf16.mxu0 0
    %267 = vmatpush1.bf16.msra.mxu0 %v243
    %268 = vmatprep.subr.bf16.mxu0 0
    %269 = vmatpush1.bf16.msra.mxu0 %v242
    %270 = vmatprep.subr.bf16.mxu0 0
    %271 = vmatpush2.bf16.msra.mxu0 0
    %272 = vmatprep.subr.bf16.mxu0 0
    %273 = vmatpush2.bf16.msra.mxu0 0
    %274 = vmatprep.subr.bf16.mxu0 0
    %275 = vmatpush2.bf16.msra.mxu0 0
    %276 = vmatprep.subr.bf16.mxu0 0
    %277 = vmatpush2.bf16.msra.mxu0 0
    %278 = vmatprep.subr.bf16.mxu0 0
    %279 = vmatpush2.bf16.msra.mxu0 0
    %280 = vmatprep.subr.bf16.mxu0 0
    %281 = vmatpush2.bf16.msra.mxu0 0
    %282 = vmatprep.subr.bf16.mxu0 0
    %283 = vmatpush2.bf16.msra.mxu0 0
    %284 = vmatprep.subr.bf16.mxu0 0
    %285 = vmatpush2.bf16.msra.mxu0 0
    %286 = vmatprep.mubr.bf16.mxu0 0
    %287 = vmatmul.mubr.bf16.gmra.mxu0 %v252
    %v288 = vpop.f32.mrf.mxu0
    %v289 = vadd.f32 %v224, %v288
    %v290 = vpop.f32.mrf.mxu0
    %v291 = vpop.f32.mrf.mxu0
    %v292 = vpop.f32.mrf.mxu0
    %293 = vdwg.mxu0
    %294 = vst [vmem:[#allocation2] sm:$0xff] %v289
    // Predicated region
    $region30: #{tpu_custom_call.1} parent=1 // pred_check
      _
    $region31: #{tpu_custom_call.1} parent=1 // pred_check_branch
      %296 = sbr.rel (0) target = $region33
    $region32: #{tpu_custom_call.1} parent=1 // pred_region
      %s298 = ssub.s32 128, 128
      %299 = vsyncadd [#allocation3], %s298
      %s301 = sshll.u32 [#allocation2], 4
      %s302 = int_to_ptr.vmem [resolvable:$true] %s301
      %304 = dma.vmem_to_hbm [thread:$0]  %s302, 128, %s7, [#allocation3]
    $region33: #{tpu_custom_call.1} parent=1 // pred_fallthru
      _
    // Predicated region
    $region34: #{tpu_custom_call.1} parent=1 // pred_check
      _
    $region35: #{tpu_custom_call.1} parent=1 // pred_check_branch
      %306 = sbr.rel (0) target = $region37
    $region36: #{tpu_custom_call.1} parent=1 // pred_region
      %307 = dma.done [#allocation3], 128
    $region37: #{tpu_custom_call.1} parent=1 // pred_fallthru
      _
    %308 = vsyncpa [#allocation3], 1

</llo_original>
